<compile_context>
chip_gen: v5e
topology: v5e:2x2
jax: 0.10.0
libtpu: 0.0.40
codegen_flags: <defaults>
</compile_context>

<pallas_src>
import numpy as np
import jax
import jax.numpy as jnp
from jax import lax
from jax.experimental import pallas as pl
from jax.experimental.pallas import tpu as pltpu

CHARNUM = 93
C_IN, C_OUT, K = 3, 6, 5
H_IN, W_IN = 42, 20                           # spatial size implied by 6*19*8 flatten
H_CONV, W_CONV = H_IN - K + 1, W_IN - K + 1   # 38, 16
H_P, W_P = H_CONV // 2, W_CONV // 2           # 19, 8
NPOS = H_P * W_P                              # 152
PATCH = C_IN * K * K                          # 75
HID = 120

# padded sizes (lane-dense / tile-aligned)
C_PAD = 8          # conv channels 6 -> 8   (sublane rows of the conv-GEMM output)
PATCH_PAD = 80     # 75 -> 80               (contraction dim, multiple of 8)
NPOS_PAD = 256     # 152 -> 256             (multiple of 128 so all lane slices stay aligned)
HID_PAD = 128      # 120 -> 128
OUT_PAD = 128      # 93 -> 128

# Flip to jnp.bfloat16 on v6e/v7x to halve matmul-operand HBM/VMEM bytes; accumulation stays
# f32 via preferred_element_type and all elementwise math (bias/max/ReLU) stays f32 (v5e-safe).
COMPUTE_DTYPE = jnp.float32


# ----------------------------- Pallas kernel -------------------------------

def _fused_kernel(pT_ref, wkT_ref, bcT_ref, w1_ref, b1_ref, w2_ref, b2_ref, o_ref):
    """Whole network for the whole (small) batch, everything resident in VMEM.

    pT_ref : (PATCH_PAD, 4*N*NPOS_PAD)  transposed, padded im2col patches
    wkT_ref: (C_PAD, PATCH_PAD)         conv weight, transposed + padded
    bcT_ref: (C_PAD, 1)                 conv bias column (f32)
    w1_ref : (C_OUT*NPOS_PAD, HID_PAD)  fc1 weight with flatten-permute + padding baked in
    b1_ref : (1, HID_PAD)               fc1 bias (f32)
    w2_ref : (HID_PAD, OUT_PAD)         fc2 weight, transposed + padded
    b2_ref : (1, OUT_PAD)               fc2 bias (f32)
    o_ref  : (N, OUT_PAD)               padded logits (slice to 93 outside)
    """
    n = o_ref.shape[0]
    chunk = n * NPOS_PAD                      # lanes per pool offset (multiple of 128)

    # conv as a single MXU call: channels in sublanes, (offset, sample, position) in lanes
    g = jnp.dot(wkT_ref[...], pT_ref[...],
                preferred_element_type=jnp.float32)       # (C_PAD, 4*chunk), f32

    # 2x2 max-pool == max over the 4 offset chunks (all slices 128-aligned)
    m = jnp.maximum(jnp.maximum(g[:, 0:chunk], g[:, chunk:2 * chunk]),
                    jnp.maximum(g[:, 2 * chunk:3 * chunk], g[:, 3 * chunk:4 * chunk]))
    a = jnp.maximum(m + bcT_ref[...], 0.0)                # (C_PAD, n*NPOS_PAD)

    # per-sample flatten, channel-major blocks of NPOS_PAD padded positions
    # (matches the w1 re-layout; only aligned lane slices + concats, no reshapes)
    rows = []
    for s in range(n):
        rows.append(jnp.concatenate(
            [a[c:c + 1, s * NPOS_PAD:(s + 1) * NPOS_PAD] for c in range(C_OUT)], axis=1))
    feats = jnp.concatenate(rows, axis=0)                 # (n, C_OUT*NPOS_PAD)

    h = jnp.dot(feats.astype(w1_ref.dtype), w1_ref[...],
                preferred_element_type=jnp.float32) + b1_ref[...]
    h = jnp.maximum(h, 0.0)                               # (n, HID_PAD)
    o_ref[...] = jnp.dot(h.astype(w2_ref.dtype), w2_ref[...],
                         preferred_element_type=jnp.float32) + b2_ref[...]


# ------------------------------- JAX glue ----------------------------------

def _build_patchesT(x, dtype):
    """x: (N, 3, 42, 20) NCHW -> (PATCH_PAD, 4*N*NPOS_PAD) transposed, zero-padded im2col.

    Lane index = d*(N*NPOS_PAD) + sample*NPOS_PAD + (ph*W_P + pw), d = 2*dh + dw.
    Patch (sublane) index k = ci*K*K + kh*K + kw (matches wc.reshape(C_OUT, -1))."""
    n = x.shape[0]
    taps = [x[:, :, kh:kh + H_CONV, kw:kw + W_CONV] for kh in range(K) for kw in range(K)]
    t = jnp.stack(taps, axis=0)                      # (25, n, 3, 38, 16)  [tap, n, ci, hc, wc]
    t = t.reshape(K * K, n, C_IN, H_P, 2, W_P, 2)    # [tap, n, ci, ph, dh, pw, dw]
    t = t.transpose(2, 0, 4, 6, 1, 3, 5)             # [ci, tap, dh, dw, n, ph, pw]
    t = t.reshape(PATCH, 4, n, NPOS)
    t = jnp.pad(t, ((0, PATCH_PAD - PATCH), (0, 0), (0, 0), (0, NPOS_PAD - NPOS)))
    return t.reshape(PATCH_PAD, 4 * n * NPOS_PAD).astype(dtype)


def _prep_params(p, dtype):
    """One-time weight re-layout: transposes, the flatten permutation, and lane padding."""
    wkT = jnp.pad(p["wc"].reshape(C_OUT, PATCH),
                  ((0, C_PAD - C_OUT), (0, PATCH_PAD - PATCH))).astype(dtype)       # (8, 80)
    bcT = jnp.pad(p["bc"].reshape(C_OUT, 1), ((0, C_PAD - C_OUT), (0, 0)))          # (8, 1)
    # fc1: PyTorch flat index = c*152 + (ph*8+pw); bake permutation + position padding into w1
    w1 = p["w1"].reshape(HID, C_OUT, NPOS).transpose(1, 2, 0)                       # (6, 152, 120)
    w1 = jnp.pad(w1, ((0, 0), (0, NPOS_PAD - NPOS), (0, HID_PAD - HID)))            # (6, 256, 128)
    w1 = w1.reshape(C_OUT * NPOS_PAD, HID_PAD).astype(dtype)                        # (1536, 128)
    b1 = jnp.pad(p["b1"], (0, HID_PAD - HID)).reshape(1, HID_PAD)                   # (1, 128)
    w2 = jnp.pad(p["w2"].T, ((0, HID_PAD - HID), (0, OUT_PAD - CHARNUM))).astype(dtype)  # (128,128)
    b2 = jnp.pad(p["b2"], (0, OUT_PAD - CHARNUM)).reshape(1, OUT_PAD)               # (1, 128)
    return wkT, bcT, w1, b1, w2, b2


def net_forward(x, params):
    n = x.shape[0]
    pT = _build_patchesT(x, COMPUTE_DTYPE)
    wkT, bcT, w1, b1, w2, b2 = _prep_params(params, COMPUTE_DTYPE)

    vmem = lambda: pl.BlockSpec(memory_space=pltpu.MemorySpace.VMEM)
    out = pl.pallas_call(
        _fused_kernel,
        out_shape=jax.ShapeDtypeStruct((n, OUT_PAD), jnp.float32),
        in_specs=[vmem() for _ in range(7)],     # whole arrays resident in VMEM (~1.6 MB total)
        out_specs=vmem(),
    )(pT, wkT, bcT, w1, b1, w2, b2)              # (n, 128)
    # TODO(synk): for large batches, grid over the batch axis with dimension_semantics=
    # ("parallel",) and VMEM-sized batch tiles (v7x has 64 MiB VMEM / 2 TCs).
    return out[:, :CHARNUM]                      # (n, 93)


# -------------------------- params & reference -----------------------------

def init_params(key):
    ks = jax.random.split(key, 6)

    def u(k, shape, fan_in):
        bound = 1.0 / np.sqrt(fan_in)
        return jax.random.uniform(k, shape, jnp.float32, -bound, bound)

    return dict(
        wc=u(ks[0], (C_OUT, C_IN, K, K), C_IN * K * K),   # conv weight (OIHW)
        bc=u(ks[1], (C_OUT,), C_IN * K * K),              # conv bias
        w1=u(ks[2], (HID, C_OUT * NPOS), C_OUT * NPOS),   # fc1 weight (out, in)
        b1=u(ks[3], (HID,), C_OUT * NPOS),
        w2=u(ks[4], (CHARNUM, HID), HID),                 # fc2 weight (out, in)
        b2=u(ks[5], (CHARNUM,), HID),
    )


def net_forward_ref(x, p):
    """Pure-JAX reference matching the PyTorch forward semantics."""
    y = lax.conv_general_dilated(
        x, p["wc"], window_strides=(1, 1), padding="VALID",
        dimension_numbers=("NCHW", "OIHW", "NCHW"))
    y = y + p["bc"].reshape(1, C_OUT, 1, 1)
    y = jnp.maximum(y, 0.0)
    y = lax.reduce_window(y, -jnp.inf, lax.max, (1, 1, 2, 2), (1, 1, 2, 2), "VALID")
    y = y.reshape(x.shape[0], C_OUT * NPOS)
    y = jnp.maximum(y @ p["w1"].T + p["b1"], 0.0)
    return y @ p["w2"].T + p["b2"]


# ---------------------------------- main ------------------------------------

if __name__ == "__main__":
    key = jax.random.PRNGKey(0)
    kx, kp = jax.random.split(key)
    x = jax.random.normal(kx, (2, C_IN, H_IN, W_IN), jnp.float32)   # NCHW (2, 3, 42, 20)
    params = init_params(kp)

    out = jax.jit(net_forward)(x, params)
    out = jax.block_until_ready(out)

    ref = net_forward_ref(x, params)
    assert out.shape == (2, CHARNUM)
    np.testing.assert_allclose(np.asarray(out), np.asarray(ref), rtol=1e-3, atol=1e-3)
    print("KERNEL_OK")
</pallas_src>

<mosaic_0001>
module attributes {stable_mosaic.version = 11 : i64} {
  func.func @_fused_kernel(%arg0: memref<80x2048xf32, #tpu.memory_space<vmem>>, %arg1: memref<8x80xf32, #tpu.memory_space<vmem>>, %arg2: memref<8x1xf32, #tpu.memory_space<vmem>>, %arg3: memref<1536x128xf32, #tpu.memory_space<vmem>>, %arg4: memref<1x128xf32, #tpu.memory_space<vmem>>, %arg5: memref<128x128xf32, #tpu.memory_space<vmem>>, %arg6: memref<1x128xf32, #tpu.memory_space<vmem>>, %arg7: memref<2x128xf32, #tpu.memory_space<vmem>>) attributes {dimension_semantics = [], scalar_prefetch = 0 : i64, scratch_operands = 0 : i64, tpu.core_type = #tpu.core_type<tc>} {
    %c0 = arith.constant 0 : index
    %c0_0 = arith.constant 0 : index
    %0 = vector.load %arg1[%c0, %c0_0] : memref<8x80xf32, #tpu.memory_space<vmem>>, vector<8x80xf32>
    %c0_1 = arith.constant 0 : index
    %c0_2 = arith.constant 0 : index
    %1 = vector.load %arg0[%c0_1, %c0_2] : memref<80x2048xf32, #tpu.memory_space<vmem>>, vector<80x2048xf32>
    %cst = arith.constant dense<0.000000e+00> : vector<8x2048xf32>
    %2 = tpu.matmul %0, %1, %cst {dimension_numbers = #tpu.dot_dimension_numbers<[1], [0], [0], [1], [0, 0, 1, 1], [], []>} : vector<8x80xf32>, vector<80x2048xf32>, vector<8x2048xf32> -> vector<8x2048xf32>
    %3 = vector.extract_strided_slice %2 {offsets = [0, 0], sizes = [8, 512], strides = [1, 1]} : vector<8x2048xf32> to vector<8x512xf32>
    %4 = vector.extract_strided_slice %2 {offsets = [0, 512], sizes = [8, 512], strides = [1, 1]} : vector<8x2048xf32> to vector<8x512xf32>
    %5 = arith.maximumf %3, %4 : vector<8x512xf32>
    %6 = vector.extract_strided_slice %2 {offsets = [0, 1024], sizes = [8, 512], strides = [1, 1]} : vector<8x2048xf32> to vector<8x512xf32>
    %7 = vector.extract_strided_slice %2 {offsets = [0, 1536], sizes = [8, 512], strides = [1, 1]} : vector<8x2048xf32> to vector<8x512xf32>
    %8 = arith.maximumf %6, %7 : vector<8x512xf32>
    %9 = arith.maximumf %5, %8 : vector<8x512xf32>
    %c0_3 = arith.constant 0 : index
    %c0_4 = arith.constant 0 : index
    %10 = vector.load %arg2[%c0_3, %c0_4] : memref<8x1xf32, #tpu.memory_space<vmem>>, vector<8x1xf32>
    %11 = vector.broadcast %10 : vector<8x1xf32> to vector<8x512xf32>
    %12 = arith.addf %9, %11 : vector<8x512xf32>
    %cst_5 = arith.constant 0.000000e+00 : f32
    %13 = vector.broadcast %cst_5 : f32 to vector<8x512xf32>
    %14 = arith.maximumf %12, %13 : vector<8x512xf32>
    %15 = vector.extract_strided_slice %14 {offsets = [0, 0], sizes = [1, 256], strides = [1, 1]} : vector<8x512xf32> to vector<1x256xf32>
    %16 = vector.extract_strided_slice %14 {offsets = [1, 0], sizes = [1, 256], strides = [1, 1]} : vector<8x512xf32> to vector<1x256xf32>
    %17 = vector.extract_strided_slice %14 {offsets = [2, 0], sizes = [1, 256], strides = [1, 1]} : vector<8x512xf32> to vector<1x256xf32>
    %18 = vector.extract_strided_slice %14 {offsets = [3, 0], sizes = [1, 256], strides = [1, 1]} : vector<8x512xf32> to vector<1x256xf32>
    %19 = vector.extract_strided_slice %14 {offsets = [4, 0], sizes = [1, 256], strides = [1, 1]} : vector<8x512xf32> to vector<1x256xf32>
    %20 = vector.extract_strided_slice %14 {offsets = [5, 0], sizes = [1, 256], strides = [1, 1]} : vector<8x512xf32> to vector<1x256xf32>
    %21 = tpu.concatenate %15, %16, %17, %18, %19, %20 in 1 : vector<1x256xf32>, vector<1x256xf32>, vector<1x256xf32>, vector<1x256xf32>, vector<1x256xf32>, vector<1x256xf32> -> vector<1x1536xf32>
    %22 = vector.extract_strided_slice %14 {offsets = [0, 256], sizes = [1, 256], strides = [1, 1]} : vector<8x512xf32> to vector<1x256xf32>
    %23 = vector.extract_strided_slice %14 {offsets = [1, 256], sizes = [1, 256], strides = [1, 1]} : vector<8x512xf32> to vector<1x256xf32>
    %24 = vector.extract_strided_slice %14 {offsets = [2, 256], sizes = [1, 256], strides = [1, 1]} : vector<8x512xf32> to vector<1x256xf32>
    %25 = vector.extract_strided_slice %14 {offsets = [3, 256], sizes = [1, 256], strides = [1, 1]} : vector<8x512xf32> to vector<1x256xf32>
    %26 = vector.extract_strided_slice %14 {offsets = [4, 256], sizes = [1, 256], strides = [1, 1]} : vector<8x512xf32> to vector<1x256xf32>
    %27 = vector.extract_strided_slice %14 {offsets = [5, 256], sizes = [1, 256], strides = [1, 1]} : vector<8x512xf32> to vector<1x256xf32>
    %28 = tpu.concatenate %22, %23, %24, %25, %26, %27 in 1 : vector<1x256xf32>, vector<1x256xf32>, vector<1x256xf32>, vector<1x256xf32>, vector<1x256xf32>, vector<1x256xf32> -> vector<1x1536xf32>
    %29 = tpu.concatenate %21, %28 in 0 : vector<1x1536xf32>, vector<1x1536xf32> -> vector<2x1536xf32>
    %c0_6 = arith.constant 0 : index
    %c0_7 = arith.constant 0 : index
    %30 = vector.load %arg3[%c0_6, %c0_7] : memref<1536x128xf32, #tpu.memory_space<vmem>>, vector<1536x128xf32>
    %cst_8 = arith.constant dense<0.000000e+00> : vector<2x128xf32>
    %31 = tpu.matmul %29, %30, %cst_8 {dimension_numbers = #tpu.dot_dimension_numbers<[1], [0], [0], [1], [0, 0, 1, 1], [], []>} : vector<2x1536xf32>, vector<1536x128xf32>, vector<2x128xf32> -> vector<2x128xf32>
    %c0_9 = arith.constant 0 : index
    %c0_10 = arith.constant 0 : index
    %32 = vector.load %arg4[%c0_9, %c0_10] : memref<1x128xf32, #tpu.memory_space<vmem>>, vector<1x128xf32>
    %33 = vector.broadcast %32 : vector<1x128xf32> to vector<2x128xf32>
    %34 = arith.addf %31, %33 : vector<2x128xf32>
    %cst_11 = arith.constant 0.000000e+00 : f32
    %35 = vector.broadcast %cst_11 : f32 to vector<2x128xf32>
    %36 = arith.maximumf %34, %35 : vector<2x128xf32>
    %c0_12 = arith.constant 0 : index
    %c0_13 = arith.constant 0 : index
    %37 = vector.load %arg5[%c0_12, %c0_13] : memref<128x128xf32, #tpu.memory_space<vmem>>, vector<128x128xf32>
    %cst_14 = arith.constant dense<0.000000e+00> : vector<2x128xf32>
    %38 = tpu.matmul %36, %37, %cst_14 {dimension_numbers = #tpu.dot_dimension_numbers<[1], [0], [0], [1], [0, 0, 1, 1], [], []>} : vector<2x128xf32>, vector<128x128xf32>, vector<2x128xf32> -> vector<2x128xf32>
    %c0_15 = arith.constant 0 : index
    %c0_16 = arith.constant 0 : index
    %39 = vector.load %arg6[%c0_15, %c0_16] : memref<1x128xf32, #tpu.memory_space<vmem>>, vector<1x128xf32>
    %40 = vector.broadcast %39 : vector<1x128xf32> to vector<2x128xf32>
    %41 = arith.addf %38, %40 : vector<2x128xf32>
    %c0_17 = arith.constant 0 : index
    %c0_18 = arith.constant 0 : index
    %42 = vector.load %arg7[%c0_17, %c0_18] : memref<2x128xf32, #tpu.memory_space<vmem>>, vector<2x128xf32>
    tpu.vector_store %arg7[%c0_17, %c0_18], %41 {strides = array<i32>} : memref<2x128xf32, #tpu.memory_space<vmem>>, vector<2x128xf32>,
    return
  }
}

</mosaic_0001>

<llo_original>
// kernel: net_forward.1
$region0: #{net_forward.1}
  #allocation0 [shape = 'u32[]', space=smem, size = 0x4, offset = 0x4, fixed_abs, tag = 'smem constant byte address 0x4 - core index']
  #allocation1 [shape = 'u32[72,128]{1,0:T(1,128)}', space=vmem, size = 0x9000, scoped, tag = 'internal scratch']
  %s0 = inlined_call_operand.vmem [shape: f32[80,2048], index: 0, kind: input, shape index: {}]
  %s1 = inlined_call_operand.vmem [shape: f32[8,80], index: 1, kind: input, shape index: {}]
  %s2 = inlined_call_operand.vmem [shape: f32[8,1], index: 2, kind: input, shape index: {}]
  %s3 = inlined_call_operand.vmem [shape: f32[1536,128], index: 3, kind: input, shape index: {}]
  %s4 = inlined_call_operand.vmem [shape: f32[1,128], index: 4, kind: input, shape index: {}]
  %s5 = inlined_call_operand.vmem [shape: f32[128,128], index: 5, kind: input, shape index: {}]
  %s6 = inlined_call_operand.vmem [shape: f32[1,128], index: 6, kind: input, shape index: {}]
  %s7 = inlined_call_operand.hbm [shape: f32[2,128], index: 7, kind: output, shape index: {}]
  %s8 = sld [smem:[#allocation0]]
  $region38: #{net_forward.1} parent=0
    _
  %s10 = ssub.s32 1, %s8
  %s11 = scalar_select 0, %s10, %s8
  $region1: #{net_forward.1} parent=0
    #allocation2 [shape = 'u8[1024]{0}', space=vmem, size = 0x400, scoped, tag = 'output window, operand 0, single buffered']
    #allocation3 [shape = 's32[1]{0}', space=sflag, size = 0x4, scoped, tag = 'scoped memory for net_forward.1']
    %12 = vsyncpa [#allocation3], 0
    // Predicated region
    $region2: #{net_forward.1} parent=1 // pred_check
      _
    $region3: #{net_forward.1} parent=1 // pred_check_branch
      %14 = sbr.rel (0) target = $region5
    $region4: #{net_forward.1} parent=1 // pred_region
      _
    $region5: #{net_forward.1} parent=1 // pred_fallthru
      _
    // Predicated region
    $region6: #{net_forward.1} parent=1 // pred_check
      _
    $region7: #{net_forward.1} parent=1 // pred_check_branch
      %16 = sbr.rel (0) target = $region9
    $region8: #{net_forward.1} parent=1 // pred_region
      _
    $region9: #{net_forward.1} parent=1 // pred_fallthru
      _
    // Predicated region
    $region10: #{net_forward.1} parent=1 // pred_check
      _
    $region11: #{net_forward.1} parent=1 // pred_check_branch
      %18 = sbr.rel (0) target = $region13
    $region12: #{net_forward.1} parent=1 // pred_region
      _
    $region13: #{net_forward.1} parent=1 // pred_fallthru
      _
    // Predicated region
    $region14: #{net_forward.1} parent=1 // pred_check
      _
    $region15: #{net_forward.1} parent=1 // pred_check_branch
      %20 = sbr.rel (0) target = $region17
    $region16: #{net_forward.1} parent=1 // pred_region
      _
    $region17: #{net_forward.1} parent=1 // pred_fallthru
      _
    // Predicated region
    $region18: #{net_forward.1} parent=1 // pred_check
      _
    $region19: #{net_forward.1} parent=1 // pred_check_branch
      %22 = sbr.rel (0) target = $region21
    $region20: #{net_forward.1} parent=1 // pred_region
      _
    $region21: #{net_forward.1} parent=1 // pred_fallthru
      _
    // Predicated region
    $region22: #{net_forward.1} parent=1 // pred_check
      _
    $region23: #{net_forward.1} parent=1 // pred_check_branch
      %24 = sbr.rel (0) target = $region25
    $region24: #{net_forward.1} parent=1 // pred_region
      _
    $region25: #{net_forward.1} parent=1 // pred_fallthru
      _
    // Predicated region
    $region26: #{net_forward.1} parent=1 // pred_check
      _
    $region27: #{net_forward.1} parent=1 // pred_check_branch
      %26 = sbr.rel (0) target = $region29
    $region28: #{net_forward.1} parent=1 // pred_region
      _
    $region29: #{net_forward.1} parent=1 // pred_fallthru
      _
    %v27 = vld [vmem:[%s1] sm:$0xff]
    %v28 = vld [vmem:[%s0] sm:$0xff]
    %v29 = vld [vmem:[%s0 + $0x8] sm:$0xff]
    %v30 = vld [vmem:[%s0 + $0x10] sm:$0xff]
    %v31 = vld [vmem:[%s0 + $0x18] sm:$0xff]
    %v32 = vld [vmem:[%s0 + $0x20] sm:$0xff]
    %v33 = vld [vmem:[%s0 + $0x28] sm:$0xff]
    %v34 = vld [vmem:[%s0 + $0x30] sm:$0xff]
    %v35 = vld [vmem:[%s0 + $0x38] sm:$0xff]
    %v36 = vld [vmem:[%s0 + $0x40] sm:$0xff]
    %v37 = vld [vmem:[%s0 + $0x48] sm:$0xff]
    %v38 = vld [vmem:[%s0 + $0x50] sm:$0xff]
    %v39 = vld [vmem:[%s0 + $0x58] sm:$0xff]
    %v40 = vld [vmem:[%s0 + $0x60] sm:$0xff]
    %v41 = vld [vmem:[%s0 + $0x68] sm:$0xff]
    %v42 = vld [vmem:[%s0 + $0x70] sm:$0xff]
    %v43 = vld [vmem:[%s0 + $0x78] sm:$0xff]
    %v44 = vld [vmem:[%s0 + $0x80] sm:$0xff]
    %v45 = vld [vmem:[%s0 + $0x88] sm:$0xff]
    %v46 = vld [vmem:[%s0 + $0x90] sm:$0xff]
    %v47 = vld [vmem:[%s0 + $0x98] sm:$0xff]
    %v48 = vld [vmem:[%s0 + $0xa0] sm:$0xff]
    %v49 = vld [vmem:[%s0 + $0xa8] sm:$0xff]
    %v50 = vld [vmem:[%s0 + $0xb0] sm:$0xff]
    %v51 = vld [vmem:[%s0 + $0xb8] sm:$0xff]
    %v52 = vld [vmem:[%s0 + $0xc0] sm:$0xff]
    %v53 = vld [vmem:[%s0 + $0xc8] sm:$0xff]
    %v54 = vld [vmem:[%s0 + $0xd0] sm:$0xff]
    %v55 = vld [vmem:[%s0 + $0xd8] sm:$0xff]
    %v56 = vld [vmem:[%s0 + $0xe0] sm:$0xff]
    %v57 = vld [vmem:[%s0 + $0xe8] sm:$0xff]
    %v58 = vld [vmem:[%s0 + $0xf0] sm:$0xff]
    %v59 = vld [vmem:[%s0 + $0xf8] sm:$0xff]
    %v60 = vld [vmem:[%s0 + $0x100] sm:$0xff]
    %v61 = vld [vmem:[%s0 + $0x108] sm:$0xff]
    %v62 = vld [vmem:[%s0 + $0x110] sm:$0xff]
    %v63 = vld [vmem:[%s0 + $0x118] sm:$0xff]
    %v64 = vld [vmem:[%s0 + $0x120] sm:$0xff]
    %v65 = vld [vmem:[%s0 + $0x128] sm:$0xff]
    %v66 = vld [vmem:[%s0 + $0x130] sm:$0xff]
    %v67 = vld [vmem:[%s0 + $0x138] sm:$0xff]
    %v68 = vld [vmem:[%s0 + $0x140] sm:$0xff]
    %v69 = vld [vmem:[%s0 + $0x148] sm:$0xff]
    %v70 = vld [vmem:[%s0 + $0x150] sm:$0xff]
    %v71 = vld [vmem:[%s0 + $0x158] sm:$0xff]
    %v72 = vld [vmem:[%s0 + $0x160] sm:$0xff]
    %v73 = vld [vmem:[%s0 + $0x168] sm:$0xff]
    %v74 = vld [vmem:[%s0 + $0x170] sm:$0xff]
    %v75 = vld [vmem:[%s0 + $0x178] sm:$0xff]
    %v76 = vld [vmem:[%s0 + $0x180] sm:$0xff]
    %v77 = vld [vmem:[%s0 + $0x188] sm:$0xff]
    %v78 = vld [vmem:[%s0 + $0x190] sm:$0xff]
    %v79 = vld [vmem:[%s0 + $0x198] sm:$0xff]
    %v80 = vld [vmem:[%s0 + $0x1a0] sm:$0xff]
    %v81 = vld [vmem:[%s0 + $0x1a8] sm:$0xff]
    %v82 = vld [vmem:[%s0 + $0x1b0] sm:$0xff]
    %v83 = vld [vmem:[%s0 + $0x1b8] sm:$0xff]
    %v84 = vld [vmem:[%s0 + $0x1c0] sm:$0xff]
    %v85 = vld [vmem:[%s0 + $0x1c8] sm:$0xff]
    %v86 = vld [vmem:[%s0 + $0x1d0] sm:$0xff]
    %v87 = vld [vmem:[%s0 + $0x1d8] sm:$0xff]
    %v88 = vld [vmem:[%s0 + $0x1e0] sm:$0xff]
    %v89 = vld [vmem:[%s0 + $0x1e8] sm:$0xff]
    %v90 = vld [vmem:[%s0 + $0x1f0] sm:$0xff]
    %v91 = vld [vmem:[%s0 + $0x1f8] sm:$0xff]
    %v92 = vld [vmem:[%s0 + $0x200] sm:$0xff]
    %v93 = vld [vmem:[%s0 + $0x208] sm:$0xff]
    %v94 = vld [vmem:[%s0 + $0x210] sm:$0xff]
    %v95 = vld [vmem:[%s0 + $0x218] sm:$0xff]
    %v96 = vld [vmem:[%s0 + $0x220] sm:$0xff]
    %v97 = vld [vmem:[%s0 + $0x228] sm:$0xff]
    %v98 = vld [vmem:[%s0 + $0x230] sm:$0xff]
    %v99 = vld [vmem:[%s0 + $0x238] sm:$0xff]
    %v100 = vld [vmem:[%s0 + $0x240] sm:$0xff]
    %v101 = vld [vmem:[%s0 + $0x248] sm:$0xff]
    %v102 = vld [vmem:[%s0 + $0x250] sm:$0xff]
    %v103 = vld [vmem:[%s0 + $0x258] sm:$0xff]
    %v104 = vld [vmem:[%s0 + $0x260] sm:$0xff]
    %v105 = vld [vmem:[%s0 + $0x268] sm:$0xff]
    %v106 = vld [vmem:[%s0 + $0x270] sm:$0xff]
    %v107 = vld [vmem:[%s0 + $0x278] sm:$0xff]
    %v108 = vld [vmem:[%s0 + $0x280] sm:$0xff]
    %v109 = vld [vmem:[%s0 + $0x288] sm:$0xff]
    %v110 = vld [vmem:[%s0 + $0x290] sm:$0xff]
    %v111 = vld [vmem:[%s0 + $0x298] sm:$0xff]
    %v112 = vld [vmem:[%s0 + $0x2a0] sm:$0xff]
    %v113 = vld [vmem:[%s0 + $0x2a8] sm:$0xff]
    %v114 = vld [vmem:[%s0 + $0x2b0] sm:$0xff]
    %v115 = vld [vmem:[%s0 + $0x2b8] sm:$0xff]
    %v116 = vld [vmem:[%s0 + $0x2c0] sm:$0xff]
    %v117 = vld [vmem:[%s0 + $0x2c8] sm:$0xff]
    %v118 = vld [vmem:[%s0 + $0x2d0] sm:$0xff]
    %v119 = vld [vmem:[%s0 + $0x2d8] sm:$0xff]
    %v120 = vld [vmem:[%s0 + $0x2e0] sm:$0xff]
    %v121 = vld [vmem:[%s0 + $0x2e8] sm:$0xff]
    %v122 = vld [vmem:[%s0 + $0x2f0] sm:$0xff]
    %v123 = vld [vmem:[%s0 + $0x2f8] sm:$0xff]
    %v124 = vld [vmem:[%s0 + $0x300] sm:$0xff]
    %v125 = vld [vmem:[%s0 + $0x308] sm:$0xff]
    %v126 = vld [vmem:[%s0 + $0x310] sm:$0xff]
    %v127 = vld [vmem:[%s0 + $0x318] sm:$0xff]
    %v128 = vld [vmem:[%s0 + $0x320] sm:$0xff]
    %v129 = vld [vmem:[%s0 + $0x328] sm:$0xff]
    %v130 = vld [vmem:[%s0 + $0x330] sm:$0xff]
    %v131 = vld [vmem:[%s0 + $0x338] sm:$0xff]
    %v132 = vld [vmem:[%s0 + $0x340] sm:$0xff]
    %v133 = vld [vmem:[%s0 + $0x348] sm:$0xff]
    %v134 = vld [vmem:[%s0 + $0x350] sm:$0xff]
    %v135 = vld [vmem:[%s0 + $0x358] sm:$0xff]
    %v136 = vld [vmem:[%s0 + $0x360] sm:$0xff]
    %v137 = vld [vmem:[%s0 + $0x368] sm:$0xff]
    %v138 = vld [vmem:[%s0 + $0x370] sm:$0xff]
    %v139 = vld [vmem:[%s0 + $0x378] sm:$0xff]
    %v140 = vld [vmem:[%s0 + $0x380] sm:$0xff]
    %v141 = vld [vmem:[%s0 + $0x388] sm:$0xff]
    %v142 = vld [vmem:[%s0 + $0x390] sm:$0xff]
    %v143 = vld [vmem:[%s0 + $0x398] sm:$0xff]
    %v144 = vld [vmem:[%s0 + $0x3a0] sm:$0xff]
    %v145 = vld [vmem:[%s0 + $0x3a8] sm:$0xff]
    %v146 = vld [vmem:[%s0 + $0x3b0] sm:$0xff]
    %v147 = vld [vmem:[%s0 + $0x3b8] sm:$0xff]
    %v148 = vld [vmem:[%s0 + $0x3c0] sm:$0xff]
    %v149 = vld [vmem:[%s0 + $0x3c8] sm:$0xff]
    %v150 = vld [vmem:[%s0 + $0x3d0] sm:$0xff]
    %v151 = vld [vmem:[%s0 + $0x3d8] sm:$0xff]
    %v152 = vld [vmem:[%s0 + $0x3e0] sm:$0xff]
    %v153 = vld [vmem:[%s0 + $0x3e8] sm:$0xff]
    %v154 = vld [vmem:[%s0 + $0x3f0] sm:$0xff]
    %v155 = vld [vmem:[%s0 + $0x3f8] sm:$0xff]
    %v156 = vld [vmem:[%s0 + $0x400] sm:$0xff]
    %v157 = vld [vmem:[%s0 + $0x408] sm:$0xff]
    %v158 = vld [vmem:[%s0 + $0x410] sm:$0xff]
    %v159 = vld [vmem:[%s0 + $0x418] sm:$0xff]
    %v160 = vld [vmem:[%s0 + $0x420] sm:$0xff]
    %v161 = vld [vmem:[%s0 + $0x428] sm:$0xff]
    %v162 = vld [vmem:[%s0 + $0x430] sm:$0xff]
    %v163 = vld [vmem:[%s0 + $0x438] sm:$0xff]
    %v164 = vld [vmem:[%s0 + $0x440] sm:$0xff]
    %v165 = vld [vmem:[%s0 + $0x448] sm:$0xff]
    %v166 = vld [vmem:[%s0 + $0x450] sm:$0xff]
    %v167 = vld [vmem:[%s0 + $0x458] sm:$0xff]
    %v168 = vld [vmem:[%s0 + $0x460] sm:$0xff]
    %v169 = vld [vmem:[%s0 + $0x468] sm:$0xff]
    %v170 = vld [vmem:[%s0 + $0x470] sm:$0xff]
    %v171 = vld [vmem:[%s0 + $0x478] sm:$0xff]
    %v172 = vld [vmem:[%s0 + $0x480] sm:$0xff]
    %v173 = vld [vmem:[%s0 + $0x488] sm:$0xff]
    %v174 = vld [vmem:[%s0 + $0x490] sm:$0xff]
    %v175 = vld [vmem:[%s0 + $0x498] sm:$0xff]
    %v176 = vld [vmem:[%s0 + $0x4a0] sm:$0xff]
    %v177 = vld [vmem:[%s0 + $0x4a8] sm:$0xff]
    %v178 = vld [vmem:[%s0 + $0x4b0] sm:$0xff]
    %v179 = vld [vmem:[%s0 + $0x4b8] sm:$0xff]
    %v180 = vld [vmem:[%s0 + $0x4c0] sm:$0xff]
    %v181 = vld [vmem:[%s0 + $0x4c8] sm:$0xff]
    %v182 = vld [vmem:[%s0 + $0x4d0] sm:$0xff]
    %v183 = vld [vmem:[%s0 + $0x4d8] sm:$0xff]
    %v184 = vld [vmem:[%s0 + $0x4e0] sm:$0xff]
    %v185 = vld [vmem:[%s0 + $0x4e8] sm:$0xff]
    %v186 = vld [vmem:[%s0 + $0x4f0] sm:$0xff]
    %v187 = vld [vmem:[%s0 + $0x4f8] sm:$0xff]
    %vm188 = vcmask 654336
    %v190 = vsel %vm188, %v27, 0
    %192 = vmatpush.msra.mxu0 0.0
    %193 = vmatpush.msra.mxu0 0.0
    %194 = vmatpush.msra.mxu0 0.0
    %195 = vmatpush.msra.mxu0 0.0
    %196 = vmatpush.msra.mxu0 0.0
    %197 = vmatpush.msra.mxu0 0.0
    %198 = vmatpush.msra.mxu0 %v172
    %199 = vmatpush.msra.mxu0 %v156
    %200 = vmatpush.msra.mxu0 %v140
    %201 = vmatpush.msra.mxu0 %v124
    %202 = vmatpush.msra.mxu0 %v108
    %203 = vmatpush.msra.mxu0 %v92
    %204 = vmatpush.msra.mxu0 %v76
    %205 = vmatpush.msra.mxu0 %v60
    %206 = vmatpush.msra.mxu0 %v44
    %207 = vmatpush.msra.mxu0 %v28
    %208 = vmatmul.f32.gmra.mxu0 %v190
    %v209 = vpop.f32.mrf.mxu0
    %v210 = vadd.f32 0.0, %v209
    %211 = vdwg.mxu0
    %212 = vmatpush.msra.mxu0 0.0
    %213 = vmatpush.msra.mxu0 0.0
    %214 = vmatpush.msra.mxu0 0.0
    %215 = vmatpush.msra.mxu0 0.0
    %216 = vmatpush.msra.mxu0 0.0
    %217 = vmatpush.msra.mxu0 0.0
    %218 = vmatpush.msra.mxu0 %v173
    %219 = vmatpush.msra.mxu0 %v157
    %220 = vmatpush.msra.mxu0 %v141
    %221 = vmatpush.msra.mxu0 %v125
    %222 = vmatpush.msra.mxu0 %v109
    %223 = vmatpush.msra.mxu0 %v93
    %224 = vmatpush.msra.mxu0 %v77
    %225 = vmatpush.msra.mxu0 %v61
    %226 = vmatpush.msra.mxu0 %v45
    %227 = vmatpush.msra.mxu0 %v29
    %228 = vmatmul.f32.gmra.mxu0 %v190
    %v229 = vpop.f32.mrf.mxu0
    %v230 = vadd.f32 0.0, %v229
    %231 = vdwg.mxu0
    %232 = vmatpush.msra.mxu0 0.0
    %233 = vmatpush.msra.mxu0 0.0
    %234 = vmatpush.msra.mxu0 0.0
    %235 = vmatpush.msra.mxu0 0.0
    %236 = vmatpush.msra.mxu0 0.0
    %237 = vmatpush.msra.mxu0 0.0
    %238 = vmatpush.msra.mxu0 %v174
    %239 = vmatpush.msra.mxu0 %v158
    %240 = vmatpush.msra.mxu0 %v142
    %241 = vmatpush.msra.mxu0 %v126
    %242 = vmatpush.msra.mxu0 %v110
    %243 = vmatpush.msra.mxu0 %v94
    %244 = vmatpush.msra.mxu0 %v78
    %245 = vmatpush.msra.mxu0 %v62
    %246 = vmatpush.msra.mxu0 %v46
    %247 = vmatpush.msra.mxu0 %v30
    %248 = vmatmul.f32.gmra.mxu0 %v190
    %v249 = vpop.f32.mrf.mxu0
    %v250 = vadd.f32 0.0, %v249
    %251 = vdwg.mxu0
    %252 = vmatpush.msra.mxu0 0.0
    %253 = vmatpush.msra.mxu0 0.0
    %254 = vmatpush.msra.mxu0 0.0
    %255 = vmatpush.msra.mxu0 0.0
    %256 = vmatpush.msra.mxu0 0.0
    %257 = vmatpush.msra.mxu0 0.0
    %258 = vmatpush.msra.mxu0 %v175
    %259 = vmatpush.msra.mxu0 %v159
    %260 = vmatpush.msra.mxu0 %v143
    %261 = vmatpush.msra.mxu0 %v127
    %262 = vmatpush.msra.mxu0 %v111
    %263 = vmatpush.msra.mxu0 %v95
    %264 = vmatpush.msra.mxu0 %v79
    %265 = vmatpush.msra.mxu0 %v63
    %266 = vmatpush.msra.mxu0 %v47
    %267 = vmatpush.msra.mxu0 %v31
    %268 = vmatmul.f32.gmra.mxu0 %v190
    %v269 = vpop.f32.mrf.mxu0
    %v270 = vadd.f32 0.0, %v269
    %271 = vdwg.mxu0
    %272 = vmatpush.msra.mxu0 0.0
    %273 = vmatpush.msra.mxu0 0.0
    %274 = vmatpush.msra.mxu0 0.0
    %275 = vmatpush.msra.mxu0 0.0
    %276 = vmatpush.msra.mxu0 0.0
    %277 = vmatpush.msra.mxu0 0.0
    %278 = vmatpush.msra.mxu0 %v176
    %279 = vmatpush.msra.mxu0 %v160
    %280 = vmatpush.msra.mxu0 %v144
    %281 = vmatpush.msra.mxu0 %v128
    %282 = vmatpush.msra.mxu0 %v112
    %283 = vmatpush.msra.mxu0 %v96
    %284 = vmatpush.msra.mxu0 %v80
    %285 = vmatpush.msra.mxu0 %v64
    %286 = vmatpush.msra.mxu0 %v48
    %287 = vmatpush.msra.mxu0 %v32
    %288 = vmatmul.f32.gmra.mxu0 %v190
    %v289 = vpop.f32.mrf.mxu0
    %v290 = vadd.f32 0.0, %v289
    %291 = vdwg.mxu0
    %292 = vmatpush.msra.mxu0 0.0
    %293 = vmatpush.msra.mxu0 0.0
    %294 = vmatpush.msra.mxu0 0.0
    %295 = vmatpush.msra.mxu0 0.0
    %296 = vmatpush.msra.mxu0 0.0
    %297 = vmatpush.msra.mxu0 0.0
    %298 = vmatpush.msra.mxu0 %v177
    %299 = vmatpush.msra.mxu0 %v161
    %300 = vmatpush.msra.mxu0 %v145
    %301 = vmatpush.msra.mxu0 %v129
    %302 = vmatpush.msra.mxu0 %v113
    %303 = vmatpush.msra.mxu0 %v97
    %304 = vmatpush.msra.mxu0 %v81
    %305 = vmatpush.msra.mxu0 %v65
    %306 = vmatpush.msra.mxu0 %v49
    %307 = vmatpush.msra.mxu0 %v33
    %308 = vmatmul.f32.gmra.mxu0 %v190
    %v309 = vpop.f32.mrf.mxu0
    %v310 = vadd.f32 0.0, %v309
    %311 = vdwg.mxu0
    %312 = vmatpush.msra.mxu0 0.0
    %313 = vmatpush.msra.mxu0 0.0
    %314 = vmatpush.msra.mxu0 0.0
    %315 = vmatpush.msra.mxu0 0.0
    %316 = vmatpush.msra.mxu0 0.0
    %317 = vmatpush.msra.mxu0 0.0
    %318 = vmatpush.msra.mxu0 %v178
    %319 = vmatpush.msra.mxu0 %v162
    %320 = vmatpush.msra.mxu0 %v146
    %321 = vmatpush.msra.mxu0 %v130
    %322 = vmatpush.msra.mxu0 %v114
    %323 = vmatpush.msra.mxu0 %v98
    %324 = vmatpush.msra.mxu0 %v82
    %325 = vmatpush.msra.mxu0 %v66
    %326 = vmatpush.msra.mxu0 %v50
    %327 = vmatpush.msra.mxu0 %v34
    %328 = vmatmul.f32.gmra.mxu0 %v190
    %v329 = vpop.f32.mrf.mxu0
    %v330 = vadd.f32 0.0, %v329
    %331 = vdwg.mxu0
    %332 = vmatpush.msra.mxu0 0.0
    %333 = vmatpush.msra.mxu0 0.0
    %334 = vmatpush.msra.mxu0 0.0
    %335 = vmatpush.msra.mxu0 0.0
    %336 = vmatpush.msra.mxu0 0.0
    %337 = vmatpush.msra.mxu0 0.0
    %338 = vmatpush.msra.mxu0 %v179
    %339 = vmatpush.msra.mxu0 %v163
    %340 = vmatpush.msra.mxu0 %v147
    %341 = vmatpush.msra.mxu0 %v131
    %342 = vmatpush.msra.mxu0 %v115
    %343 = vmatpush.msra.mxu0 %v99
    %344 = vmatpush.msra.mxu0 %v83
    %345 = vmatpush.msra.mxu0 %v67
    %346 = vmatpush.msra.mxu0 %v51
    %347 = vmatpush.msra.mxu0 %v35
    %348 = vmatmul.f32.gmra.mxu0 %v190
    %v349 = vpop.f32.mrf.mxu0
    %v350 = vadd.f32 0.0, %v349
    %351 = vdwg.mxu0
    %352 = vmatpush.msra.mxu0 0.0
    %353 = vmatpush.msra.mxu0 0.0
    %354 = vmatpush.msra.mxu0 0.0
    %355 = vmatpush.msra.mxu0 0.0
    %356 = vmatpush.msra.mxu0 0.0
    %357 = vmatpush.msra.mxu0 0.0
    %358 = vmatpush.msra.mxu0 %v180
    %359 = vmatpush.msra.mxu0 %v164
    %360 = vmatpush.msra.mxu0 %v148
    %361 = vmatpush.msra.mxu0 %v132
    %362 = vmatpush.msra.mxu0 %v116
    %363 = vmatpush.msra.mxu0 %v100
    %364 = vmatpush.msra.mxu0 %v84
    %365 = vmatpush.msra.mxu0 %v68
    %366 = vmatpush.msra.mxu0 %v52
    %367 = vmatpush.msra.mxu0 %v36
    %368 = vmatmul.f32.gmra.mxu0 %v190
    %v369 = vpop.f32.mrf.mxu0
    %v370 = vadd.f32 0.0, %v369
    %371 = vdwg.mxu0
    %372 = vmatpush.msra.mxu0 0.0
    %373 = vmatpush.msra.mxu0 0.0
    %374 = vmatpush.msra.mxu0 0.0
    %375 = vmatpush.msra.mxu0 0.0
    %376 = vmatpush.msra.mxu0 0.0
    %377 = vmatpush.msra.mxu0 0.0
    %378 = vmatpush.msra.mxu0 %v181
    %379 = vmatpush.msra.mxu0 %v165
    %380 = vmatpush.msra.mxu0 %v149
    %381 = vmatpush.msra.mxu0 %v133
    %382 = vmatpush.msra.mxu0 %v117
    %383 = vmatpush.msra.mxu0 %v101
    %384 = vmatpush.msra.mxu0 %v85
    %385 = vmatpush.msra.mxu0 %v69
    %386 = vmatpush.msra.mxu0 %v53
    %387 = vmatpush.msra.mxu0 %v37
    %388 = vmatmul.f32.gmra.mxu0 %v190
    %v389 = vpop.f32.mrf.mxu0
    %v390 = vadd.f32 0.0, %v389
    %391 = vdwg.mxu0
    %392 = vmatpush.msra.mxu0 0.0
    %393 = vmatpush.msra.mxu0 0.0
    %394 = vmatpush.msra.mxu0 0.0
    %395 = vmatpush.msra.mxu0 0.0
    %396 = vmatpush.msra.mxu0 0.0
    %397 = vmatpush.msra.mxu0 0.0
    %398 = vmatpush.msra.mxu0 %v182
    %399 = vmatpush.msra.mxu0 %v166
    %400 = vmatpush.msra.mxu0 %v150
    %401 = vmatpush.msra.mxu0 %v134
    %402 = vmatpush.msra.mxu0 %v118
    %403 = vmatpush.msra.mxu0 %v102
    %404 = vmatpush.msra.mxu0 %v86
    %405 = vmatpush.msra.mxu0 %v70
    %406 = vmatpush.msra.mxu0 %v54
    %407 = vmatpush.msra.mxu0 %v38
    %408 = vmatmul.f32.gmra.mxu0 %v190
    %v409 = vpop.f32.mrf.mxu0
    %v410 = vadd.f32 0.0, %v409
    %411 = vdwg.mxu0
    %412 = vmatpush.msra.mxu0 0.0
    %413 = vmatpush.msra.mxu0 0.0
    %414 = vmatpush.msra.mxu0 0.0
    %415 = vmatpush.msra.mxu0 0.0
    %416 = vmatpush.msra.mxu0 0.0
    %417 = vmatpush.msra.mxu0 0.0
    %418 = vmatpush.msra.mxu0 %v183
    %419 = vmatpush.msra.mxu0 %v167
    %420 = vmatpush.msra.mxu0 %v151
    %421 = vmatpush.msra.mxu0 %v135
    %422 = vmatpush.msra.mxu0 %v119
    %423 = vmatpush.msra.mxu0 %v103
    %424 = vmatpush.msra.mxu0 %v87
    %425 = vmatpush.msra.mxu0 %v71
    %426 = vmatpush.msra.mxu0 %v55
    %427 = vmatpush.msra.mxu0 %v39
    %428 = vmatmul.f32.gmra.mxu0 %v190
    %v429 = vpop.f32.mrf.mxu0
    %v430 = vadd.f32 0.0, %v429
    %431 = vdwg.mxu0
    %432 = vmatpush.msra.mxu0 0.0
    %433 = vmatpush.msra.mxu0 0.0
    %434 = vmatpush.msra.mxu0 0.0
    %435 = vmatpush.msra.mxu0 0.0
    %436 = vmatpush.msra.mxu0 0.0
    %437 = vmatpush.msra.mxu0 0.0
    %438 = vmatpush.msra.mxu0 %v184
    %439 = vmatpush.msra.mxu0 %v168
    %440 = vmatpush.msra.mxu0 %v152
    %441 = vmatpush.msra.mxu0 %v136
    %442 = vmatpush.msra.mxu0 %v120
    %443 = vmatpush.msra.mxu0 %v104
    %444 = vmatpush.msra.mxu0 %v88
    %445 = vmatpush.msra.mxu0 %v72
    %446 = vmatpush.msra.mxu0 %v56
    %447 = vmatpush.msra.mxu0 %v40
    %448 = vmatmul.f32.gmra.mxu0 %v190
    %v449 = vpop.f32.mrf.mxu0
    %v450 = vadd.f32 0.0, %v449
    %451 = vdwg.mxu0
    %452 = vmatpush.msra.mxu0 0.0
    %453 = vmatpush.msra.mxu0 0.0
    %454 = vmatpush.msra.mxu0 0.0
    %455 = vmatpush.msra.mxu0 0.0
    %456 = vmatpush.msra.mxu0 0.0
    %457 = vmatpush.msra.mxu0 0.0
    %458 = vmatpush.msra.mxu0 %v185
    %459 = vmatpush.msra.mxu0 %v169
    %460 = vmatpush.msra.mxu0 %v153
    %461 = vmatpush.msra.mxu0 %v137
    %462 = vmatpush.msra.mxu0 %v121
    %463 = vmatpush.msra.mxu0 %v105
    %464 = vmatpush.msra.mxu0 %v89
    %465 = vmatpush.msra.mxu0 %v73
    %466 = vmatpush.msra.mxu0 %v57
    %467 = vmatpush.msra.mxu0 %v41
    %468 = vmatmul.f32.gmra.mxu0 %v190
    %v469 = vpop.f32.mrf.mxu0
    %v470 = vadd.f32 0.0, %v469
    %471 = vdwg.mxu0
    %472 = vmatpush.msra.mxu0 0.0
    %473 = vmatpush.msra.mxu0 0.0
    %474 = vmatpush.msra.mxu0 0.0
    %475 = vmatpush.msra.mxu0 0.0
    %476 = vmatpush.msra.mxu0 0.0
    %477 = vmatpush.msra.mxu0 0.0
    %478 = vmatpush.msra.mxu0 %v186
    %479 = vmatpush.msra.mxu0 %v170
    %480 = vmatpush.msra.mxu0 %v154
    %481 = vmatpush.msra.mxu0 %v138
    %482 = vmatpush.msra.mxu0 %v122
    %483 = vmatpush.msra.mxu0 %v106
    %484 = vmatpush.msra.mxu0 %v90
    %485 = vmatpush.msra.mxu0 %v74
    %486 = vmatpush.msra.mxu0 %v58
    %487 = vmatpush.msra.mxu0 %v42
    %488 = vmatmul.f32.gmra.mxu0 %v190
    %v489 = vpop.f32.mrf.mxu0
    %v490 = vadd.f32 0.0, %v489
    %491 = vdwg.mxu0
    %492 = vmatpush.msra.mxu0 0.0
    %493 = vmatpush.msra.mxu0 0.0
    %494 = vmatpush.msra.mxu0 0.0
    %495 = vmatpush.msra.mxu0 0.0
    %496 = vmatpush.msra.mxu0 0.0
    %497 = vmatpush.msra.mxu0 0.0
    %498 = vmatpush.msra.mxu0 %v187
    %499 = vmatpush.msra.mxu0 %v171
    %500 = vmatpush.msra.mxu0 %v155
    %501 = vmatpush.msra.mxu0 %v139
    %502 = vmatpush.msra.mxu0 %v123
    %503 = vmatpush.msra.mxu0 %v107
    %504 = vmatpush.msra.mxu0 %v91
    %505 = vmatpush.msra.mxu0 %v75
    %506 = vmatpush.msra.mxu0 %v59
    %507 = vmatpush.msra.mxu0 %v43
    %508 = vmatmul.f32.gmra.mxu0 %v190
    %v509 = vpop.f32.mrf.mxu0
    %v510 = vadd.f32 0.0, %v509
    %511 = vdwg.mxu0
    %v512 = vmax.f32 %v210, %v290
    %v513 = vmax.f32 %v230, %v310
    %v514 = vmax.f32 %v250, %v330
    %v515 = vmax.f32 %v270, %v350
    %v516 = vmax.f32 %v370, %v450
    %v517 = vmax.f32 %v390, %v470
    %v518 = vmax.f32 %v410, %v490
    %v519 = vmax.f32 %v430, %v510
    %v520 = vmax.f32 %v512, %v516
    %v521 = vmax.f32 %v513, %v517
    %v522 = vmax.f32 %v514, %v518
    %v523 = vmax.f32 %v515, %v519
    %v524 = vld [vmem:[%s2] sm:$0xff]
    %526 = vset.pattern.permute.xlu0 0
    %527 = vperm.xlu0 %526, %v524
    %v528 = vpop.permute.xlu0 %527
    %v530 = vadd.f32 %v520, %v528
    %v531 = vadd.f32 %v521, %v528
    %v532 = vadd.f32 %v522, %v528
    %v533 = vadd.f32 %v523, %v528
    %v534 = vmax.f32 %v530, 0.0
    %v535 = vmax.f32 %v531, 0.0
    %v536 = vmax.f32 %v532, 0.0
    %v537 = vmax.f32 %v533, 0.0
    %v540 = vrot.slane %v534, 1
    %v541 = vrot.slane %v535, 1
    %v544 = vrot.slane %v534, 2
    %v545 = vrot.slane %v535, 2
    %v548 = vrot.slane %v534, 3
    %v549 = vrot.slane %v535, 3
    %v552 = vrot.slane %v534, 4
    %v553 = vrot.slane %v535, 4
    %v556 = vrot.slane %v534, 5
    %v557 = vrot.slane %v535, 5
    %v562 = vrot.slane %v536, 1
    %v563 = vrot.slane %v537, 1
    %v564 = vrot.slane %v536, 2
    %v565 = vrot.slane %v537, 2
    %v566 = vrot.slane %v536, 3
    %v567 = vrot.slane %v537, 3
    %v568 = vrot.slane %v536, 4
    %v569 = vrot.slane %v537, 4
    %v570 = vrot.slane %v536, 5
    %v571 = vrot.slane %v537, 5
    %v572 = vrot.slane %v536, 7
    %v573 = vrot.slane %v537, 7
    %v574 = vrot.slane %v562, 7
    %v575 = vrot.slane %v563, 7
    %v576 = vrot.slane %v564, 7
    %v577 = vrot.slane %v565, 7
    %v578 = vrot.slane %v566, 7
    %v579 = vrot.slane %v567, 7
    %v580 = vrot.slane %v568, 7
    %v581 = vrot.slane %v569, 7
    %v582 = vrot.slane %v570, 7
    %v583 = vrot.slane %v571, 7
    %vm596 = vcmask 1040384
    %v597 = vsel %vm596, %v534, %v572
    %v598 = vsel %vm596, %v535, %v573
    %v599 = vsel %vm596, %v540, %v574
    %v600 = vsel %vm596, %v541, %v575
    %v601 = vsel %vm596, %v544, %v576
    %v602 = vsel %vm596, %v545, %v577
    %v603 = vsel %vm596, %v548, %v578
    %v604 = vsel %vm596, %v549, %v579
    %v605 = vsel %vm596, %v552, %v580
    %v606 = vsel %vm596, %v553, %v581
    %v607 = vsel %vm596, %v556, %v582
    %v608 = vsel %vm596, %v557, %v583
    %v609 = vld [vmem:[%s3] sm:$0xff]
    %v610 = vld [vmem:[%s3 + $0x8] sm:$0xff]
    %v611 = vld [vmem:[%s3 + $0x10] sm:$0xff]
    %v612 = vld [vmem:[%s3 + $0x18] sm:$0xff]
    %v613 = vld [vmem:[%s3 + $0x20] sm:$0xff]
    %v614 = vld [vmem:[%s3 + $0x28] sm:$0xff]
    %v615 = vld [vmem:[%s3 + $0x30] sm:$0xff]
    %v616 = vld [vmem:[%s3 + $0x38] sm:$0xff]
    %v617 = vld [vmem:[%s3 + $0x40] sm:$0xff]
    %v618 = vld [vmem:[%s3 + $0x48] sm:$0xff]
    %v619 = vld [vmem:[%s3 + $0x50] sm:$0xff]
    %v620 = vld [vmem:[%s3 + $0x58] sm:$0xff]
    %v621 = vld [vmem:[%s3 + $0x60] sm:$0xff]
    %v622 = vld [vmem:[%s3 + $0x68] sm:$0xff]
    %v623 = vld [vmem:[%s3 + $0x70] sm:$0xff]
    %v624 = vld [vmem:[%s3 + $0x78] sm:$0xff]
    %v625 = vld [vmem:[%s3 + $0x80] sm:$0xff]
    %v626 = vld [vmem:[%s3 + $0x88] sm:$0xff]
    %v627 = vld [vmem:[%s3 + $0x90] sm:$0xff]
    %v628 = vld [vmem:[%s3 + $0x98] sm:$0xff]
    %v629 = vld [vmem:[%s3 + $0xa0] sm:$0xff]
    %v630 = vld [vmem:[%s3 + $0xa8] sm:$0xff]
    %v631 = vld [vmem:[%s3 + $0xb0] sm:$0xff]
    %v632 = vld [vmem:[%s3 + $0xb8] sm:$0xff]
    %v633 = vld [vmem:[%s3 + $0xc0] sm:$0xff]
    %v634 = vld [vmem:[%s3 + $0xc8] sm:$0xff]
    %v635 = vld [vmem:[%s3 + $0xd0] sm:$0xff]
    %v636 = vld [vmem:[%s3 + $0xd8] sm:$0xff]
    %v637 = vld [vmem:[%s3 + $0xe0] sm:$0xff]
    %v638 = vld [vmem:[%s3 + $0xe8] sm:$0xff]
    %v639 = vld [vmem:[%s3 + $0xf0] sm:$0xff]
    %v640 = vld [vmem:[%s3 + $0xf8] sm:$0xff]
    %v641 = vld [vmem:[%s3 + $0x100] sm:$0xff]
    %v642 = vld [vmem:[%s3 + $0x108] sm:$0xff]
    %v643 = vld [vmem:[%s3 + $0x110] sm:$0xff]
    %v644 = vld [vmem:[%s3 + $0x118] sm:$0xff]
    %v645 = vld [vmem:[%s3 + $0x120] sm:$0xff]
    %v646 = vld [vmem:[%s3 + $0x128] sm:$0xff]
    %v647 = vld [vmem:[%s3 + $0x130] sm:$0xff]
    %v648 = vld [vmem:[%s3 + $0x138] sm:$0xff]
    %v649 = vld [vmem:[%s3 + $0x140] sm:$0xff]
    %v650 = vld [vmem:[%s3 + $0x148] sm:$0xff]
    %v651 = vld [vmem:[%s3 + $0x150] sm:$0xff]
    %v652 = vld [vmem:[%s3 + $0x158] sm:$0xff]
    %v653 = vld [vmem:[%s3 + $0x160] sm:$0xff]
    %v654 = vld [vmem:[%s3 + $0x168] sm:$0xff]
    %v655 = vld [vmem:[%s3 + $0x170] sm:$0xff]
    %v656 = vld [vmem:[%s3 + $0x178] sm:$0xff]
    %v657 = vld [vmem:[%s3 + $0x180] sm:$0xff]
    %v658 = vld [vmem:[%s3 + $0x188] sm:$0xff]
    %v659 = vld [vmem:[%s3 + $0x190] sm:$0xff]
    %v660 = vld [vmem:[%s3 + $0x198] sm:$0xff]
    %v661 = vld [vmem:[%s3 + $0x1a0] sm:$0xff]
    %v662 = vld [vmem:[%s3 + $0x1a8] sm:$0xff]
    %v663 = vld [vmem:[%s3 + $0x1b0] sm:$0xff]
    %v664 = vld [vmem:[%s3 + $0x1b8] sm:$0xff]
    %v665 = vld [vmem:[%s3 + $0x1c0] sm:$0xff]
    %v666 = vld [vmem:[%s3 + $0x1c8] sm:$0xff]
    %v667 = vld [vmem:[%s3 + $0x1d0] sm:$0xff]
    %v668 = vld [vmem:[%s3 + $0x1d8] sm:$0xff]
    %v669 = vld [vmem:[%s3 + $0x1e0] sm:$0xff]
    %v670 = vld [vmem:[%s3 + $0x1e8] sm:$0xff]
    %v671 = vld [vmem:[%s3 + $0x1f0] sm:$0xff]
    %v672 = vld [vmem:[%s3 + $0x1f8] sm:$0xff]
    %v673 = vld [vmem:[%s3 + $0x200] sm:$0xff]
    %v674 = vld [vmem:[%s3 + $0x208] sm:$0xff]
    %v675 = vld [vmem:[%s3 + $0x210] sm:$0xff]
    %v676 = vld [vmem:[%s3 + $0x218] sm:$0xff]
    %v677 = vld [vmem:[%s3 + $0x220] sm:$0xff]
    %v678 = vld [vmem:[%s3 + $0x228] sm:$0xff]
    %v679 = vld [vmem:[%s3 + $0x230] sm:$0xff]
    %v680 = vld [vmem:[%s3 + $0x238] sm:$0xff]
    %v681 = vld [vmem:[%s3 + $0x240] sm:$0xff]
    %v682 = vld [vmem:[%s3 + $0x248] sm:$0xff]
    %v683 = vld [vmem:[%s3 + $0x250] sm:$0xff]
    %v684 = vld [vmem:[%s3 + $0x258] sm:$0xff]
    %v685 = vld [vmem:[%s3 + $0x260] sm:$0xff]
    %v686 = vld [vmem:[%s3 + $0x268] sm:$0xff]
    %v687 = vld [vmem:[%s3 + $0x270] sm:$0xff]
    %v688 = vld [vmem:[%s3 + $0x278] sm:$0xff]
    %v689 = vld [vmem:[%s3 + $0x280] sm:$0xff]
    %v690 = vld [vmem:[%s3 + $0x288] sm:$0xff]
    %v691 = vld [vmem:[%s3 + $0x290] sm:$0xff]
    %v692 = vld [vmem:[%s3 + $0x298] sm:$0xff]
    %v693 = vld [vmem:[%s3 + $0x2a0] sm:$0xff]
    %v694 = vld [vmem:[%s3 + $0x2a8] sm:$0xff]
    %v695 = vld [vmem:[%s3 + $0x2b0] sm:$0xff]
    %v696 = vld [vmem:[%s3 + $0x2b8] sm:$0xff]
    %v697 = vld [vmem:[%s3 + $0x2c0] sm:$0xff]
    %v698 = vld [vmem:[%s3 + $0x2c8] sm:$0xff]
    %v699 = vld [vmem:[%s3 + $0x2d0] sm:$0xff]
    %v700 = vld [vmem:[%s3 + $0x2d8] sm:$0xff]
    %v701 = vld [vmem:[%s3 + $0x2e0] sm:$0xff]
    %v702 = vld [vmem:[%s3 + $0x2e8] sm:$0xff]
    %v703 = vld [vmem:[%s3 + $0x2f0] sm:$0xff]
    %v704 = vld [vmem:[%s3 + $0x2f8] sm:$0xff]
    %v705 = vld [vmem:[%s3 + $0x300] sm:$0xff]
    %v706 = vld [vmem:[%s3 + $0x308] sm:$0xff]
    %v707 = vld [vmem:[%s3 + $0x310] sm:$0xff]
    %v708 = vld [vmem:[%s3 + $0x318] sm:$0xff]
    %v709 = vld [vmem:[%s3 + $0x320] sm:$0xff]
    %v710 = vld [vmem:[%s3 + $0x328] sm:$0xff]
    %v711 = vld [vmem:[%s3 + $0x330] sm:$0xff]
    %v712 = vld [vmem:[%s3 + $0x338] sm:$0xff]
    %v713 = vld [vmem:[%s3 + $0x340] sm:$0xff]
    %v714 = vld [vmem:[%s3 + $0x348] sm:$0xff]
    %v715 = vld [vmem:[%s3 + $0x350] sm:$0xff]
    %v716 = vld [vmem:[%s3 + $0x358] sm:$0xff]
    %v717 = vld [vmem:[%s3 + $0x360] sm:$0xff]
    %v718 = vld [vmem:[%s3 + $0x368] sm:$0xff]
    %v719 = vld [vmem:[%s3 + $0x370] sm:$0xff]
    %v720 = vld [vmem:[%s3 + $0x378] sm:$0xff]
    %v721 = vld [vmem:[%s3 + $0x380] sm:$0xff]
    %v722 = vld [vmem:[%s3 + $0x388] sm:$0xff]
    %v723 = vld [vmem:[%s3 + $0x390] sm:$0xff]
    %v724 = vld [vmem:[%s3 + $0x398] sm:$0xff]
    %v725 = vld [vmem:[%s3 + $0x3a0] sm:$0xff]
    %v726 = vld [vmem:[%s3 + $0x3a8] sm:$0xff]
    %v727 = vld [vmem:[%s3 + $0x3b0] sm:$0xff]
    %v728 = vld [vmem:[%s3 + $0x3b8] sm:$0xff]
    %v729 = vld [vmem:[%s3 + $0x3c0] sm:$0xff]
    %v730 = vld [vmem:[%s3 + $0x3c8] sm:$0xff]
    %v731 = vld [vmem:[%s3 + $0x3d0] sm:$0xff]
    %v732 = vld [vmem:[%s3 + $0x3d8] sm:$0xff]
    %v733 = vld [vmem:[%s3 + $0x3e0] sm:$0xff]
    %v734 = vld [vmem:[%s3 + $0x3e8] sm:$0xff]
    %v735 = vld [vmem:[%s3 + $0x3f0] sm:$0xff]
    %v736 = vld [vmem:[%s3 + $0x3f8] sm:$0xff]
    %v737 = vld [vmem:[%s3 + $0x400] sm:$0xff]
    %v738 = vld [vmem:[%s3 + $0x408] sm:$0xff]
    %v739 = vld [vmem:[%s3 + $0x410] sm:$0xff]
    %v740 = vld [vmem:[%s3 + $0x418] sm:$0xff]
    %v741 = vld [vmem:[%s3 + $0x420] sm:$0xff]
    %v742 = vld [vmem:[%s3 + $0x428] sm:$0xff]
    %v743 = vld [vmem:[%s3 + $0x430] sm:$0xff]
    %v744 = vld [vmem:[%s3 + $0x438] sm:$0xff]
    %v745 = vld [vmem:[%s3 + $0x440] sm:$0xff]
    %v746 = vld [vmem:[%s3 + $0x448] sm:$0xff]
    %v747 = vld [vmem:[%s3 + $0x450] sm:$0xff]
    %v748 = vld [vmem:[%s3 + $0x458] sm:$0xff]
    %v749 = vld [vmem:[%s3 + $0x460] sm:$0xff]
    %v750 = vld [vmem:[%s3 + $0x468] sm:$0xff]
    %v751 = vld [vmem:[%s3 + $0x470] sm:$0xff]
    %v752 = vld [vmem:[%s3 + $0x478] sm:$0xff]
    %v753 = vld [vmem:[%s3 + $0x480] sm:$0xff]
    %v754 = vld [vmem:[%s3 + $0x488] sm:$0xff]
    %v755 = vld [vmem:[%s3 + $0x490] sm:$0xff]
    %v756 = vld [vmem:[%s3 + $0x498] sm:$0xff]
    %v757 = vld [vmem:[%s3 + $0x4a0] sm:$0xff]
    %v758 = vld [vmem:[%s3 + $0x4a8] sm:$0xff]
    %v759 = vld [vmem:[%s3 + $0x4b0] sm:$0xff]
    %v760 = vld [vmem:[%s3 + $0x4b8] sm:$0xff]
    %v761 = vld [vmem:[%s3 + $0x4c0] sm:$0xff]
    %v762 = vld [vmem:[%s3 + $0x4c8] sm:$0xff]
    %v763 = vld [vmem:[%s3 + $0x4d0] sm:$0xff]
    %v764 = vld [vmem:[%s3 + $0x4d8] sm:$0xff]
    %v765 = vld [vmem:[%s3 + $0x4e0] sm:$0xff]
    %v766 = vld [vmem:[%s3 + $0x4e8] sm:$0xff]
    %v767 = vld [vmem:[%s3 + $0x4f0] sm:$0xff]
    %v768 = vld [vmem:[%s3 + $0x4f8] sm:$0xff]
    %v769 = vld [vmem:[%s3 + $0x500] sm:$0xff]
    %v770 = vld [vmem:[%s3 + $0x508] sm:$0xff]
    %v771 = vld [vmem:[%s3 + $0x510] sm:$0xff]
    %v772 = vld [vmem:[%s3 + $0x518] sm:$0xff]
    %v773 = vld [vmem:[%s3 + $0x520] sm:$0xff]
    %v774 = vld [vmem:[%s3 + $0x528] sm:$0xff]
    %v775 = vld [vmem:[%s3 + $0x530] sm:$0xff]
    %v776 = vld [vmem:[%s3 + $0x538] sm:$0xff]
    %v777 = vld [vmem:[%s3 + $0x540] sm:$0xff]
    %v778 = vld [vmem:[%s3 + $0x548] sm:$0xff]
    %v779 = vld [vmem:[%s3 + $0x550] sm:$0xff]
    %v780 = vld [vmem:[%s3 + $0x558] sm:$0xff]
    %v781 = vld [vmem:[%s3 + $0x560] sm:$0xff]
    %v782 = vld [vmem:[%s3 + $0x568] sm:$0xff]
    %v783 = vld [vmem:[%s3 + $0x570] sm:$0xff]
    %v784 = vld [vmem:[%s3 + $0x578] sm:$0xff]
    %v785 = vld [vmem:[%s3 + $0x580] sm:$0xff]
    %v786 = vld [vmem:[%s3 + $0x588] sm:$0xff]
    %v787 = vld [vmem:[%s3 + $0x590] sm:$0xff]
    %v788 = vld [vmem:[%s3 + $0x598] sm:$0xff]
    %v789 = vld [vmem:[%s3 + $0x5a0] sm:$0xff]
    %v790 = vld [vmem:[%s3 + $0x5a8] sm:$0xff]
    %v791 = vld [vmem:[%s3 + $0x5b0] sm:$0xff]
    %v792 = vld [vmem:[%s3 + $0x5b8] sm:$0xff]
    %v793 = vld [vmem:[%s3 + $0x5c0] sm:$0xff]
    %v794 = vld [vmem:[%s3 + $0x5c8] sm:$0xff]
    %v795 = vld [vmem:[%s3 + $0x5d0] sm:$0xff]
    %v796 = vld [vmem:[%s3 + $0x5d8] sm:$0xff]
    %v797 = vld [vmem:[%s3 + $0x5e0] sm:$0xff]
    %v798 = vld [vmem:[%s3 + $0x5e8] sm:$0xff]
    %v799 = vld [vmem:[%s3 + $0x5f0] sm:$0xff]
    %v800 = vld [vmem:[%s3 + $0x5f8] sm:$0xff]
    %v801 = vld [vmem:[%s4] sm:$0x1]
    %v803 = vperm.slane %v801, 0
    %805 = vmatpush.msra.mxu0 %v624
    %806 = vmatpush.msra.mxu0 %v623
    %807 = vmatpush.msra.mxu0 %v622
    %808 = vmatpush.msra.mxu0 %v621
    %809 = vmatpush.msra.mxu0 %v620
    %810 = vmatpush.msra.mxu0 %v619
    %811 = vmatpush.msra.mxu0 %v618
    %812 = vmatpush.msra.mxu0 %v617
    %813 = vmatpush.msra.mxu0 %v616
    %814 = vmatpush.msra.mxu0 %v615
    %815 = vmatpush.msra.mxu0 %v614
    %816 = vmatpush.msra.mxu0 %v613
    %817 = vmatpush.msra.mxu0 %v612
    %818 = vmatpush.msra.mxu0 %v611
    %819 = vmatpush.msra.mxu0 %v610
    %820 = vmatpush.msra.mxu0 %v609
    %821 = vmatmul.f32.gmra.mxu0 %v597
    %v822 = vpop.f32.mrf.mxu0
    %v823 = vadd.f32 %v803, %v822
    %824 = vdwg.mxu0
    %825 = vmatpush.msra.mxu0 %v640
    %826 = vmatpush.msra.mxu0 %v639
    %827 = vmatpush.msra.mxu0 %v638
    %828 = vmatpush.msra.mxu0 %v637
    %829 = vmatpush.msra.mxu0 %v636
    %830 = vmatpush.msra.mxu0 %v635
    %831 = vmatpush.msra.mxu0 %v634
    %832 = vmatpush.msra.mxu0 %v633
    %833 = vmatpush.msra.mxu0 %v632
    %834 = vmatpush.msra.mxu0 %v631
    %835 = vmatpush.msra.mxu0 %v630
    %836 = vmatpush.msra.mxu0 %v629
    %837 = vmatpush.msra.mxu0 %v628
    %838 = vmatpush.msra.mxu0 %v627
    %839 = vmatpush.msra.mxu0 %v626
    %840 = vmatpush.msra.mxu0 %v625
    %841 = vmatmul.f32.gmra.mxu0 %v598
    %v842 = vpop.f32.mrf.mxu0
    %v843 = vadd.f32 %v823, %v842
    %844 = vdwg.mxu0
    %845 = vmatpush.msra.mxu0 %v656
    %846 = vmatpush.msra.mxu0 %v655
    %847 = vmatpush.msra.mxu0 %v654
    %848 = vmatpush.msra.mxu0 %v653
    %849 = vmatpush.msra.mxu0 %v652
    %850 = vmatpush.msra.mxu0 %v651
    %851 = vmatpush.msra.mxu0 %v650
    %852 = vmatpush.msra.mxu0 %v649
    %853 = vmatpush.msra.mxu0 %v648
    %854 = vmatpush.msra.mxu0 %v647
    %855 = vmatpush.msra.mxu0 %v646
    %856 = vmatpush.msra.mxu0 %v645
    %857 = vmatpush.msra.mxu0 %v644
    %858 = vmatpush.msra.mxu0 %v643
    %859 = vmatpush.msra.mxu0 %v642
    %860 = vmatpush.msra.mxu0 %v641
    %861 = vmatmul.f32.gmra.mxu0 %v599
    %v862 = vpop.f32.mrf.mxu0
    %v863 = vadd.f32 %v843, %v862
    %864 = vdwg.mxu0
    %865 = vmatpush.msra.mxu0 %v672
    %866 = vmatpush.msra.mxu0 %v671
    %867 = vmatpush.msra.mxu0 %v670
    %868 = vmatpush.msra.mxu0 %v669
    %869 = vmatpush.msra.mxu0 %v668
    %870 = vmatpush.msra.mxu0 %v667
    %871 = vmatpush.msra.mxu0 %v666
    %872 = vmatpush.msra.mxu0 %v665
    %873 = vmatpush.msra.mxu0 %v664
    %874 = vmatpush.msra.mxu0 %v663
    %875 = vmatpush.msra.mxu0 %v662
    %876 = vmatpush.msra.mxu0 %v661
    %877 = vmatpush.msra.mxu0 %v660
    %878 = vmatpush.msra.mxu0 %v659
    %879 = vmatpush.msra.mxu0 %v658
    %880 = vmatpush.msra.mxu0 %v657
    %881 = vmatmul.f32.gmra.mxu0 %v600
    %v882 = vpop.f32.mrf.mxu0
    %v883 = vadd.f32 %v863, %v882
    %884 = vdwg.mxu0
    %885 = vmatpush.msra.mxu0 %v688
    %886 = vmatpush.msra.mxu0 %v687
    %887 = vmatpush.msra.mxu0 %v686
    %888 = vmatpush.msra.mxu0 %v685
    %889 = vmatpush.msra.mxu0 %v684
    %890 = vmatpush.msra.mxu0 %v683
    %891 = vmatpush.msra.mxu0 %v682
    %892 = vmatpush.msra.mxu0 %v681
    %893 = vmatpush.msra.mxu0 %v680
    %894 = vmatpush.msra.mxu0 %v679
    %895 = vmatpush.msra.mxu0 %v678
    %896 = vmatpush.msra.mxu0 %v677
    %897 = vmatpush.msra.mxu0 %v676
    %898 = vmatpush.msra.mxu0 %v675
    %899 = vmatpush.msra.mxu0 %v674
    %900 = vmatpush.msra.mxu0 %v673
    %901 = vmatmul.f32.gmra.mxu0 %v601
    %v902 = vpop.f32.mrf.mxu0
    %v903 = vadd.f32 %v883, %v902
    %904 = vdwg.mxu0
    %905 = vmatpush.msra.mxu0 %v704
    %906 = vmatpush.msra.mxu0 %v703
    %907 = vmatpush.msra.mxu0 %v702
    %908 = vmatpush.msra.mxu0 %v701
    %909 = vmatpush.msra.mxu0 %v700
    %910 = vmatpush.msra.mxu0 %v699
    %911 = vmatpush.msra.mxu0 %v698
    %912 = vmatpush.msra.mxu0 %v697
    %913 = vmatpush.msra.mxu0 %v696
    %914 = vmatpush.msra.mxu0 %v695
    %915 = vmatpush.msra.mxu0 %v694
    %916 = vmatpush.msra.mxu0 %v693
    %917 = vmatpush.msra.mxu0 %v692
    %918 = vmatpush.msra.mxu0 %v691
    %919 = vmatpush.msra.mxu0 %v690
    %920 = vmatpush.msra.mxu0 %v689
    %921 = vmatmul.f32.gmra.mxu0 %v602
    %v922 = vpop.f32.mrf.mxu0
    %v923 = vadd.f32 %v903, %v922
    %924 = vdwg.mxu0
    %925 = vmatpush.msra.mxu0 %v720
    %926 = vmatpush.msra.mxu0 %v719
    %927 = vmatpush.msra.mxu0 %v718
    %928 = vmatpush.msra.mxu0 %v717
    %929 = vmatpush.msra.mxu0 %v716
    %930 = vmatpush.msra.mxu0 %v715
    %931 = vmatpush.msra.mxu0 %v714
    %932 = vmatpush.msra.mxu0 %v713
    %933 = vmatpush.msra.mxu0 %v712
    %934 = vmatpush.msra.mxu0 %v711
    %935 = vmatpush.msra.mxu0 %v710
    %936 = vmatpush.msra.mxu0 %v709
    %937 = vmatpush.msra.mxu0 %v708
    %938 = vmatpush.msra.mxu0 %v707
    %939 = vmatpush.msra.mxu0 %v706
    %940 = vmatpush.msra.mxu0 %v705
    %941 = vmatmul.f32.gmra.mxu0 %v603
    %v942 = vpop.f32.mrf.mxu0
    %v943 = vadd.f32 %v923, %v942
    %944 = vdwg.mxu0
    %945 = vmatpush.msra.mxu0 %v736
    %946 = vmatpush.msra.mxu0 %v735
    %947 = vmatpush.msra.mxu0 %v734
    %948 = vmatpush.msra.mxu0 %v733
    %949 = vmatpush.msra.mxu0 %v732
    %950 = vmatpush.msra.mxu0 %v731
    %951 = vmatpush.msra.mxu0 %v730
    %952 = vmatpush.msra.mxu0 %v729
    %953 = vmatpush.msra.mxu0 %v728
    %954 = vmatpush.msra.mxu0 %v727
    %955 = vmatpush.msra.mxu0 %v726
    %956 = vmatpush.msra.mxu0 %v725
    %957 = vmatpush.msra.mxu0 %v724
    %958 = vmatpush.msra.mxu0 %v723
    %959 = vmatpush.msra.mxu0 %v722
    %960 = vmatpush.msra.mxu0 %v721
    %961 = vmatmul.f32.gmra.mxu0 %v604
    %v962 = vpop.f32.mrf.mxu0
    %v963 = vadd.f32 %v943, %v962
    %964 = vdwg.mxu0
    %965 = vmatpush.msra.mxu0 %v752
    %966 = vmatpush.msra.mxu0 %v751
    %967 = vmatpush.msra.mxu0 %v750
    %968 = vmatpush.msra.mxu0 %v749
    %969 = vmatpush.msra.mxu0 %v748
    %970 = vmatpush.msra.mxu0 %v747
    %971 = vmatpush.msra.mxu0 %v746
    %972 = vmatpush.msra.mxu0 %v745
    %973 = vmatpush.msra.mxu0 %v744
    %974 = vmatpush.msra.mxu0 %v743
    %975 = vmatpush.msra.mxu0 %v742
    %976 = vmatpush.msra.mxu0 %v741
    %977 = vmatpush.msra.mxu0 %v740
    %978 = vmatpush.msra.mxu0 %v739
    %979 = vmatpush.msra.mxu0 %v738
    %980 = vmatpush.msra.mxu0 %v737
    %981 = vmatmul.f32.gmra.mxu0 %v605
    %v982 = vpop.f32.mrf.mxu0
    %v983 = vadd.f32 %v963, %v982
    %984 = vdwg.mxu0
    %985 = vmatpush.msra.mxu0 %v768
    %986 = vmatpush.msra.mxu0 %v767
    %987 = vmatpush.msra.mxu0 %v766
    %988 = vmatpush.msra.mxu0 %v765
    %989 = vmatpush.msra.mxu0 %v764
    %990 = vmatpush.msra.mxu0 %v763
    %991 = vmatpush.msra.mxu0 %v762
    %992 = vmatpush.msra.mxu0 %v761
    %993 = vmatpush.msra.mxu0 %v760
    %994 = vmatpush.msra.mxu0 %v759
    %995 = vmatpush.msra.mxu0 %v758
    %996 = vmatpush.msra.mxu0 %v757
    %997 = vmatpush.msra.mxu0 %v756
    %998 = vmatpush.msra.mxu0 %v755
    %999 = vmatpush.msra.mxu0 %v754
    %1000 = vmatpush.msra.mxu0 %v753
    %1001 = vmatmul.f32.gmra.mxu0 %v606
    %v1002 = vpop.f32.mrf.mxu0
    %v1003 = vadd.f32 %v983, %v1002
    %1004 = vdwg.mxu0
    %1005 = vmatpush.msra.mxu0 %v784
    %1006 = vmatpush.msra.mxu0 %v783
    %1007 = vmatpush.msra.mxu0 %v782
    %1008 = vmatpush.msra.mxu0 %v781
    %1009 = vmatpush.msra.mxu0 %v780
    %1010 = vmatpush.msra.mxu0 %v779
    %1011 = vmatpush.msra.mxu0 %v778
    %1012 = vmatpush.msra.mxu0 %v777
    %1013 = vmatpush.msra.mxu0 %v776
    %1014 = vmatpush.msra.mxu0 %v775
    %1015 = vmatpush.msra.mxu0 %v774
    %1016 = vmatpush.msra.mxu0 %v773
    %1017 = vmatpush.msra.mxu0 %v772
    %1018 = vmatpush.msra.mxu0 %v771
    %1019 = vmatpush.msra.mxu0 %v770
    %1020 = vmatpush.msra.mxu0 %v769
    %1021 = vmatmul.f32.gmra.mxu0 %v607
    %v1022 = vpop.f32.mrf.mxu0
    %v1023 = vadd.f32 %v1003, %v1022
    %1024 = vdwg.mxu0
    %1025 = vmatpush.msra.mxu0 %v800
    %1026 = vmatpush.msra.mxu0 %v799
    %1027 = vmatpush.msra.mxu0 %v798
    %1028 = vmatpush.msra.mxu0 %v797
    %1029 = vmatpush.msra.mxu0 %v796
    %1030 = vmatpush.msra.mxu0 %v795
    %1031 = vmatpush.msra.mxu0 %v794
    %1032 = vmatpush.msra.mxu0 %v793
    %1033 = vmatpush.msra.mxu0 %v792
    %1034 = vmatpush.msra.mxu0 %v791
    %1035 = vmatpush.msra.mxu0 %v790
    %1036 = vmatpush.msra.mxu0 %v789
    %1037 = vmatpush.msra.mxu0 %v788
    %1038 = vmatpush.msra.mxu0 %v787
    %1039 = vmatpush.msra.mxu0 %v786
    %1040 = vmatpush.msra.mxu0 %v785
    %1041 = vmatmul.f32.gmra.mxu0 %v608
    %v1042 = vpop.f32.mrf.mxu0
    %v1043 = vadd.f32 %v1023, %v1042
    %1044 = vdwg.mxu0
    %v1045 = vmax.f32 %v1043, 0.0
    %v1046 = vld [vmem:[%s5] sm:$0xff]
    %v1047 = vld [vmem:[%s5 + $0x8] sm:$0xff]
    %v1048 = vld [vmem:[%s5 + $0x10] sm:$0xff]
    %v1049 = vld [vmem:[%s5 + $0x18] sm:$0xff]
    %v1050 = vld [vmem:[%s5 + $0x20] sm:$0xff]
    %v1051 = vld [vmem:[%s5 + $0x28] sm:$0xff]
    %v1052 = vld [vmem:[%s5 + $0x30] sm:$0xff]
    %v1053 = vld [vmem:[%s5 + $0x38] sm:$0xff]
    %v1054 = vld [vmem:[%s5 + $0x40] sm:$0xff]
    %v1055 = vld [vmem:[%s5 + $0x48] sm:$0xff]
    %v1056 = vld [vmem:[%s5 + $0x50] sm:$0xff]
    %v1057 = vld [vmem:[%s5 + $0x58] sm:$0xff]
    %v1058 = vld [vmem:[%s5 + $0x60] sm:$0xff]
    %v1059 = vld [vmem:[%s5 + $0x68] sm:$0xff]
    %v1060 = vld [vmem:[%s5 + $0x70] sm:$0xff]
    %v1061 = vld [vmem:[%s5 + $0x78] sm:$0xff]
    %v1062 = vld [vmem:[%s6] sm:$0x1]
    %v1064 = vperm.slane %v1062, 0
    %1066 = vmatpush.msra.mxu0 %v1061
    %1067 = vmatpush.msra.mxu0 %v1060
    %1068 = vmatpush.msra.mxu0 %v1059
    %1069 = vmatpush.msra.mxu0 %v1058
    %1070 = vmatpush.msra.mxu0 %v1057
    %1071 = vmatpush.msra.mxu0 %v1056
    %1072 = vmatpush.msra.mxu0 %v1055
    %1073 = vmatpush.msra.mxu0 %v1054
    %1074 = vmatpush.msra.mxu0 %v1053
    %1075 = vmatpush.msra.mxu0 %v1052
    %1076 = vmatpush.msra.mxu0 %v1051
    %1077 = vmatpush.msra.mxu0 %v1050
    %1078 = vmatpush.msra.mxu0 %v1049
    %1079 = vmatpush.msra.mxu0 %v1048
    %1080 = vmatpush.msra.mxu0 %v1047
    %1081 = vmatpush.msra.mxu0 %v1046
    %1082 = vmatmul.f32.gmra.mxu0 %v1045
    %v1083 = vpop.f32.mrf.mxu0
    %v1084 = vadd.f32 %v1064, %v1083
    %1085 = vdwg.mxu0
    %1086 = vst [vmem:[#allocation2] sm:$0x3] %v1084
    // Predicated region
    $region30: #{net_forward.1} parent=1 // pred_check
      _
    $region31: #{net_forward.1} parent=1 // pred_check_branch
      %1088 = sbr.rel (0) target = $region33
    $region32: #{net_forward.1} parent=1 // pred_region
      %1090 = vsyncadd [#allocation3], 0
      %s1092 = sshll.u32 [#allocation2], 4
      %s1093 = int_to_ptr.vmem [resolvable:$true] %s1092
      %s1094 = sshll.u32 %s7, 4
      %s1095 = int_to_ptr.hbm [resolvable:$true] %s1094
      %1097 = dma.vmem_to_hbm [thread:$0]  %s1093, 32, %s1095, [#allocation3]
    $region33: #{net_forward.1} parent=1 // pred_fallthru
      _
    // Predicated region
    $region34: #{net_forward.1} parent=1 // pred_check
      _
    $region35: #{net_forward.1} parent=1 // pred_check_branch
      %1099 = sbr.rel (0) target = $region37
    $region36: #{net_forward.1} parent=1 // pred_region
      %1101 = dma.done [#allocation3], 32
    $region37: #{net_forward.1} parent=1 // pred_fallthru
      _
    %1102 = vsyncpa [#allocation3], 1

</llo_original>
